<compile_context>
chip_gen: v5e
topology: v5e:2x2
jax: 0.10.0
libtpu: 0.0.40
codegen_flags: <defaults>
</compile_context>

<pallas_src>
import jax
import jax.numpy as jnp
from jax.experimental import pallas as pl
from jax.experimental.pallas import tpu as pltpu


_VMEM_SOFT_BUDGET = 36 * 1024 * 1024   # estimate budget used when choosing tb
_VMEM_LIMIT_CAP = 56 * 1024 * 1024     # v7x-safe scoped-VMEM cap (64 MiB physical)


def _linear_sq_loss_kernel(x_ref, w_ref, b_ref, logits_ref, partial_ref):
    # bf16 LHS/RHS on the MXU, f32 accumulation; bias broadcast on the VPU.
    logits = jnp.dot(x_ref[...], w_ref[...], preferred_element_type=jnp.float32)
    logits = logits + b_ref[...]                       # (1, Hp) -> (tb, Hp)
    logits_ref[...] = logits.astype(logits_ref.dtype)  # bf16 aux writeback

    # Loss partials stay in f32 (computed from the pre-cast f32 logits).
    sq = logits * logits
    tb, Hp = sq.shape
    # (tb, Hp) -> (tb//8, 8, Hp) is layout-preserving (row-group split aligns
    # with the natural sublane tiling), so the sum over axis 0 is whole-vreg
    # VPU adds, no XLU cross-lane reduce.
    acc8 = sq.reshape(tb // 8, 8, Hp).sum(axis=0)      # (8, Hp)
    # Fold the lane-tiles of Hp together with 128-aligned slices (whole-vreg
    # extracts + VPU adds). Static Python loop: Hp is known at trace time.
    part = acc8[:, 0:128]
    for j in range(1, Hp // 128):
        part = part + acc8[:, j * 128:(j + 1) * 128]
    partial_ref[0] = part                              # (8, 128) per-tile partial


def _vmem_estimate(tb, D, Hp):
    """Conservative live-VMEM estimate (everything counted double-buffered)."""
    bf16, f32 = 2, 4
    x_buf = 2 * tb * D * bf16          # streamed x tiles
    w_buf = 2 * D * Hp * bf16          # grid-invariant weight (counted x2)
    b_buf = 2 * 1 * Hp * f32           # grid-invariant bias
    logits_out = 2 * tb * Hp * bf16    # bf16 aux writeback buffers
    part_out = 2 * 8 * 128 * f32       # per-tile loss partial
    live = 2 * tb * Hp * f32           # in-kernel f32 logits + sq slabs
    return x_buf + w_buf + b_buf + logits_out + part_out + live


def _choose_tb(B, requested, D, Hp, budget):
    """Largest multiple of 8 dividing B, <= requested, fitting the VMEM budget."""
    if B % 8 != 0:
        raise ValueError(f"batch size {B} must be a multiple of 8")
    tb = min(requested, B)
    tb -= tb % 8
    while tb > 8 and B % tb != 0:
        tb -= 8
    tb = max(tb, 8)
    # Shrink while the conservative VMEM estimate exceeds the soft budget.
    while tb > 8 and _vmem_estimate(tb, D, Hp) > budget:
        nt = tb // 2
        nt -= nt % 8
        while nt > 8 and B % nt != 0:
            nt -= 8
        nt = max(nt, 8)
        if nt == tb:
            break
        tb = nt
    # TODO(synk): if the resident (D, Hp) weight alone blows the budget (huge
    # D*H on v7x), add a K(D) grid axis ("arbitrary") with a (tb, Hp) f32
    # accumulator instead of keeping the full weight resident.
    return tb


def jax_scalar_function_pallas(params, x, *, tb=1024):
    """Pallas equivalent of jax_function(params, x) -> (scalar, aux)."""
    w, b = params["w"], params["b"]
    B, D = x.shape
    H = w.shape[1]

    # Pad H to a lane-dense multiple of 128: unmasked stores on the logits
    # writeback and clean (8,128) blocks everywhere. Padded columns are zero.
    Hp = ((H + 127) // 128) * 128
    if Hp != H:
        w = jnp.pad(w, ((0, 0), (0, Hp - H)))
        b = jnp.pad(b, (0, Hp - H))

    # bf16 MXU operands (f32 accumulation happens inside the kernel).
    x_bf = x.astype(jnp.bfloat16)
    w_bf = w.astype(jnp.bfloat16)
    b2 = b.reshape(1, Hp).astype(jnp.float32)

    tb = _choose_tb(B, tb, D, Hp, _VMEM_SOFT_BUDGET)
    num_tiles = B // tb

    est = _vmem_estimate(tb, D, Hp)
    # Always set the limit: v5e's default scoped VMEM is 16 MiB, v6e/v7x 32 MiB;
    # cap well below v7x's 64 MiB physical VMEM.
    vmem_limit = int(min(max(est * 3 // 2, 32 * 1024 * 1024), _VMEM_LIMIT_CAP))

    cost = pl.CostEstimate(
        flops=2 * B * D * Hp + 3 * B * Hp,
        transcendentals=0,
        bytes_accessed=(2 * (B * D + D * Hp + B * Hp)          # bf16 streams
                        + 4 * (Hp + num_tiles * 8 * 128)),      # f32 bias + partials
    )

    grid_spec = pltpu.PrefetchScalarGridSpec(
        num_scalar_prefetch=0,
        grid=(num_tiles,),
        in_specs=[
            pl.BlockSpec((tb, D), lambda i: (i, 0)),     # x tile (streamed, bf16)
            pl.BlockSpec((D, Hp), lambda i: (0, 0)),     # weight (grid-invariant, bf16)
            pl.BlockSpec((1, Hp), lambda i: (0, 0)),     # bias (grid-invariant, f32)
        ],
        out_specs=(
            pl.BlockSpec((tb, Hp), lambda i: (i, 0)),       # logits aux, bf16, lane-dense
            pl.BlockSpec((1, 8, 128), lambda i: (i, 0, 0)),  # per-tile loss partial
        ),
    )

    logits_pad, partials = pl.pallas_call(
        _linear_sq_loss_kernel,
        out_shape=(
            jax.ShapeDtypeStruct((B, Hp), jnp.bfloat16),           # aux (logits)
            jax.ShapeDtypeStruct((num_tiles, 8, 128), jnp.float32),  # loss partials
        ),
        grid_spec=grid_spec,
        compiler_params=pltpu.CompilerParams(
            dimension_semantics=("parallel",),   # no cross-step carry
            vmem_limit_bytes=vmem_limit,
        ),
        cost_estimate=cost,
    )(x_bf, w_bf, b2)

    # Tiny epilogue reduction in XLA; mean divisor uses the un-padded H
    # (padded columns contribute exactly zero).
    loss = jnp.sum(partials) / jnp.float32(B * H)
    logits = logits_pad[:, :H] if Hp != H else logits_pad
    return loss, logits


class WrappedJaxScalarFunctionPallas:
    """Mirrors WrappedJaxScalarFunction.forward: returns (scalar_out, aux)."""

    def __init__(self, params):
        self.params = params
        # TODO(synk): the torch autograd plumbing (value_and_grad caching per
        # requires_grad pattern, ctx.save_for_backward, backward, jax<->torch
        # tensor conversion) has no Pallas equivalent; only the forward-pass
        # compute is implemented here.

    def forward(self, x, *, tb=1024):
        return jax_scalar_function_pallas(self.params, x, tb=tb)

    __call__ = forward


def _reference(params, x):
    # Matches the kernel's numerics: bf16-rounded operands, f32 accumulation.
    xb = x.astype(jnp.bfloat16).astype(jnp.float32)
    wb = params["w"].astype(jnp.bfloat16).astype(jnp.float32)
    logits = xb @ wb + params["b"].astype(jnp.float32)
    return jnp.mean(logits ** 2), logits


if __name__ == "__main__":
    key = jax.random.PRNGKey(0)
    k_w, k_b, k_x = jax.random.split(key, 3)

    # Small shapes; H=32 exercises the pad-to-128 + slice-back path,
    # tb=16 with B=32 exercises the tiled, parallel batch axis (2 tiles).
    B, D, H = 32, 16, 32
    params = {
        "w": jax.random.normal(k_w, (D, H), dtype=jnp.float32) * 0.1,
        "b": jax.random.normal(k_b, (H,), dtype=jnp.float32) * 0.1,
    }
    x = jax.random.normal(k_x, (B, D), dtype=jnp.float32)

    module = WrappedJaxScalarFunctionPallas(params)
    out, aux = module(x, tb=16)
    out = jax.block_until_ready(out)
    aux = jax.block_until_ready(aux)

    ref_out, ref_aux = _reference(params, x)
    assert out.shape == (), out.shape
    assert aux.shape == (B, H), aux.shape
    assert aux.dtype == jnp.bfloat16, aux.dtype
    # Loss is computed in f32 from the pre-cast logits: tight tolerance.
    assert jnp.allclose(out, ref_out, rtol=1e-3, atol=1e-6), (out, ref_out)
    # Aux is stored as bf16: compare with bf16-level tolerance.
    assert jnp.allclose(aux.astype(jnp.float32), ref_aux, rtol=2e-2, atol=2e-2)

    print("KERNEL_OK")
</pallas_src>

<mosaic_0001>
module attributes {stable_mosaic.version = 11 : i64} {
  func.func @_linear_sq_loss_kernel(%arg0: i32, %arg1: memref<16x16xbf16, #tpu.memory_space<vmem>>, %arg2: memref<16x128xbf16, #tpu.memory_space<vmem>>, %arg3: memref<1x128xf32, #tpu.memory_space<vmem>>, %arg4: memref<16x128xbf16, #tpu.memory_space<vmem>>, %arg5: memref<1x8x128xf32, #tpu.memory_space<vmem>>) attributes {dimension_semantics = [#tpu.dimension_semantics<parallel>], iteration_bounds = array<i64: 2>, scalar_prefetch = 0 : i64, scratch_operands = 0 : i64, tpu.core_type = #tpu.core_type<tc>, window_params = [{transform_indices = @transform_0, window_bounds = array<i64: 16, 16>}, {pipeline_mode = #tpu.pipeline_mode<synchronous>, transform_indices = @transform_1, window_bounds = array<i64: 16, 128>}, {pipeline_mode = #tpu.pipeline_mode<synchronous>, transform_indices = @transform_2, window_bounds = array<i64: 1, 128>}, {transform_indices = @transform_3, window_bounds = array<i64: 16, 128>}, {transform_indices = @transform_4, window_bounds = array<i64: 1, 8, 128>}]} {
    %c0 = arith.constant 0 : index
    %c0_0 = arith.constant 0 : index
    %0 = vector.load %arg1[%c0, %c0_0] : memref<16x16xbf16, #tpu.memory_space<vmem>>, vector<16x16xbf16>
    %c0_1 = arith.constant 0 : index
    %c0_2 = arith.constant 0 : index
    %1 = vector.load %arg2[%c0_1, %c0_2] : memref<16x128xbf16, #tpu.memory_space<vmem>>, vector<16x128xbf16>
    %cst = arith.constant dense<0.000000e+00> : vector<16x128xf32>
    %2 = tpu.matmul %0, %1, %cst {dimension_numbers = #tpu.dot_dimension_numbers<[1], [0], [0], [1], [0, 0, 1, 1], [], []>} : vector<16x16xbf16>, vector<16x128xbf16>, vector<16x128xf32> -> vector<16x128xf32>
    %c0_3 = arith.constant 0 : index
    %c0_4 = arith.constant 0 : index
    %3 = vector.load %arg3[%c0_3, %c0_4] : memref<1x128xf32, #tpu.memory_space<vmem>>, vector<1x128xf32>
    %4 = vector.broadcast %3 : vector<1x128xf32> to vector<16x128xf32>
    %5 = arith.addf %2, %4 : vector<16x128xf32>
    %6 = arith.truncf %5 : vector<16x128xf32> to vector<16x128xbf16>
    %c0_5 = arith.constant 0 : index
    %c0_6 = arith.constant 0 : index
    %7 = vector.load %arg4[%c0_5, %c0_6] : memref<16x128xbf16, #tpu.memory_space<vmem>>, vector<16x128xbf16>
    tpu.vector_store %arg4[%c0_5, %c0_6], %6 {strides = array<i32>} : memref<16x128xbf16, #tpu.memory_space<vmem>>, vector<16x128xbf16>,
    %8 = arith.mulf %5, %5 : vector<16x128xf32>
    %9 = vector.shape_cast %8 : vector<16x128xf32> to vector<2x8x128xf32>
    %cst_7 = arith.constant dense<0.000000e+00> : vector<8x128xf32>
    %10 = vector.multi_reduction <add>, %9, %cst_7 [0] : vector<2x8x128xf32> to vector<8x128xf32>
    %c0_8 = arith.constant 0 : index
    %c0_9 = arith.constant 0 : index
    %c0_10 = arith.constant 0 : index
    %11 = vector.load %arg5[%c0_8, %c0_9, %c0_10] : memref<1x8x128xf32, #tpu.memory_space<vmem>>, vector<1x8x128xf32>
    %12 = vector.shape_cast %11 : vector<1x8x128xf32> to vector<8x128xf32>
    %13 = vector.shape_cast %10 : vector<8x128xf32> to vector<1x8x128xf32>
    tpu.vector_store %arg5[%c0_8, %c0_9, %c0_10], %13 {strides = array<i32>} : memref<1x8x128xf32, #tpu.memory_space<vmem>>, vector<1x8x128xf32>,
    return
  }
  func.func @transform_0(%arg0: i32) -> (i32, i32) {
    %c0_i32 = arith.constant 0 : i32
    %c0_i32_0 = arith.constant 0 : i32
    return %arg0, %c0_i32 : i32, i32
  }
  func.func @transform_1(%arg0: i32) -> (i32, i32) {
    %c0_i32 = arith.constant 0 : i32
    %c0_i32_0 = arith.constant 0 : i32
    %c0_i32_1 = arith.constant 0 : i32
    return %c0_i32, %c0_i32_0 : i32, i32
  }
  func.func @transform_2(%arg0: i32) -> (i32, i32) {
    %c0_i32 = arith.constant 0 : i32
    %c0_i32_0 = arith.constant 0 : i32
    %c0_i32_1 = arith.constant 0 : i32
    return %c0_i32, %c0_i32_0 : i32, i32
  }
  func.func @transform_3(%arg0: i32) -> (i32, i32) {
    %c0_i32 = arith.constant 0 : i32
    %c0_i32_0 = arith.constant 0 : i32
    return %arg0, %c0_i32 : i32, i32
  }
  func.func @transform_4(%arg0: i32) -> (i32, i32, i32) {
    %c0_i32 = arith.constant 0 : i32
    %c0_i32_0 = arith.constant 0 : i32
    %c0_i32_1 = arith.constant 0 : i32
    return %arg0, %c0_i32, %c0_i32_0 : i32, i32, i32
  }
}

</mosaic_0001>

<llo_original>
// kernel: tpu_custom_call.1
$region0: #{tpu_custom_call.1}
  #allocation0 [shape = 'u32[]', space=smem, size = 0x4, offset = 0x4, fixed_abs, tag = 'smem constant byte address 0x4 - core index']
  #allocation1 [shape = 'u32[72,128]{1,0:T(1,128)}', space=vmem, size = 0x9000, scoped, tag = 'internal scratch']
  %s0 = inlined_call_operand.vmem [shape: bf16[32,16], index: 0, kind: input, shape index: {}]
  %s1 = inlined_call_operand.vmem [shape: bf16[16,128], index: 1, kind: input, shape index: {}]
  %s2 = inlined_call_operand.vmem [shape: f32[1,128], index: 2, kind: input, shape index: {}]
  %s3 = inlined_call_operand.hbm [shape: bf16[32,128], index: 3, kind: output, shape index: {0}]
  %s4 = inlined_call_operand.hbm [shape: f32[2,8,128], index: 4, kind: output, shape index: {1}]
  %5 = xla_tuple %s3, %s4
  %s6 = sld [smem:[#allocation0]]
  $region53: #{tpu_custom_call.1} parent=0
    _
  %s8 = ssub.s32 1, %s6
  %s9 = scalar_select 0, %s8, %s6
  $region1: #{tpu_custom_call.1} parent=0
    #allocation2 [shape = 'u8[8192]{0}', space=vmem, size = 0x2000, scoped, tag = 'output window, operand 0']
    #allocation3 [shape = 's32[2]{0}', space=sflag, size = 0x8, scoped, tag = 'scoped memory for tpu_custom_call.1']
    #allocation4 [shape = 'u8[8192]{0}', space=vmem, size = 0x2000, scoped, tag = 'output window, operand 1']
    #allocation5 [shape = 's32[2]{0}', space=sflag, size = 0x8, scoped, tag = 'scoped memory for tpu_custom_call.1']
    %10 = vsyncpa [#allocation3], 0
    %s11 = scalar_lea.sflag [#allocation3], 1
    %12 = vsyncpa %s11, 0
    %13 = vsyncpa [#allocation5], 0
    %s14 = scalar_lea.sflag [#allocation5], 1
    %15 = vsyncpa %s14, 0
    loop: start=0, step=1, limit=4
    $region2: #{tpu_custom_call.1} parent=1 // loop_pre_header
      _
    $region3: #{tpu_custom_call.1} parent=1 // loop_header
      %s17 = sphi 0, %s21
      %p18 = scmp.ge.s32.totalorder %s17, 4
      %s27 = sphi 0, %s29
      %s30 = sphi 0, %s27
      %s31 = sphi 0, %s30
      %s47 = sphi 0, %s31
      %s51 = sphi 0, %s51
      %s53 = sphi 0, %s51
      %s54 = sphi 0, %s53
      %s68 = sphi 0, %s54
      %s72 = sphi 0, %s72
      %s74 = sphi 0, %s72
      %s75 = sphi 0, %s74
      %s89 = sphi 0, %s75
      %s95 = sphi 0, %s97
      %s98 = sphi 0, %s95
      %s99 = sphi 0, %s98
      %s115 = sphi 0, %s99
      %s121 = sphi 0, %s123
      %s124 = sphi 0, %s121
      %s125 = sphi 0, %s124
      %s141 = sphi 0, %s125
    $region4: #{tpu_custom_call.1} parent=1 // loop_header_branch
      %20 = sbr.rel (%p18) target = $region8
    $region5: #{tpu_custom_call.1} parent=1 // loop_body
      %s22 = ssub.s32 %s17, 1
      %s23 = ssub.s32 %s17, 2
      %s24 = sadd.s32 %s17, 1
      %s25 = ssub.s32 %s17, %s24
      %p26 = scmp.eq.s32.totalorder %s25, 0
      %s28 = sadd.s32 %s27, 1
      %s29 = scalar_select %p26, %s27, %s28
      %p32 = pneg %p26
      %p33 = scmp.eq.s32.totalorder %s17, 1
      %p34 = por %p32, %p33
      %p35 = scmp.ne.s32.totalorder %s27, %s30
      %p36 = scmp.eq.s32.totalorder %s17, 0
      %p37 = por %p35, %p36
      %p38 = scmp.ne.s32.totalorder %s27, %s30
      %p39 = scmp.eq.s32.totalorder %s22, 1
      %p40 = por %p38, %p39
      %p41 = scmp.ne.s32.totalorder %s30, %s31
      %p42 = scmp.eq.s32.totalorder %s22, 0
      %p43 = por %p41, %p42
      %p44 = scmp.ne.s32.totalorder %s30, %s31
      %p45 = scmp.eq.s32.totalorder %s23, 1
      %p46 = por %p44, %p45
      %p48 = scmp.ne.s32.totalorder %s31, %s47
      %p49 = scmp.eq.s32.totalorder %s23, 0
      %p50 = por %p48, %p49
      %s52 = sadd.s32 %s51, 1
      %p55 = scmp.eq.s32.totalorder %s17, 1
      %p56 = scmp.ne.s32.totalorder %s51, %s53
      %p57 = scmp.eq.s32.totalorder %s17, 0
      %p58 = por %p56, %p57
      %p59 = scmp.ne.s32.totalorder %s51, %s53
      %p60 = scmp.eq.s32.totalorder %s22, 1
      %p61 = por %p59, %p60
      %p62 = scmp.ne.s32.totalorder %s53, %s54
      %p63 = scmp.eq.s32.totalorder %s22, 0
      %p64 = por %p62, %p63
      %p65 = scmp.ne.s32.totalorder %s53, %s54
      %p66 = scmp.eq.s32.totalorder %s23, 1
      %p67 = por %p65, %p66
      %p69 = scmp.ne.s32.totalorder %s54, %s68
      %p70 = scmp.eq.s32.totalorder %s23, 0
      %p71 = por %p69, %p70
      %s73 = sadd.s32 %s72, 1
      %p76 = scmp.eq.s32.totalorder %s17, 1
      %p77 = scmp.ne.s32.totalorder %s72, %s74
      %p78 = scmp.eq.s32.totalorder %s17, 0
      %p79 = por %p77, %p78
      %p80 = scmp.ne.s32.totalorder %s72, %s74
      %p81 = scmp.eq.s32.totalorder %s22, 1
      %p82 = por %p80, %p81
      %p83 = scmp.ne.s32.totalorder %s74, %s75
      %p84 = scmp.eq.s32.totalorder %s22, 0
      %p85 = por %p83, %p84
      %p86 = scmp.ne.s32.totalorder %s74, %s75
      %p87 = scmp.eq.s32.totalorder %s23, 1
      %p88 = por %p86, %p87
      %p90 = scmp.ne.s32.totalorder %s75, %s89
      %p91 = scmp.eq.s32.totalorder %s23, 0
      %p92 = por %p90, %p91
      %s93 = ssub.s32 %s17, %s24
      %p94 = scmp.eq.s32.totalorder %s93, 0
      %s96 = sadd.s32 %s95, 1
      %s97 = scalar_select %p94, %s95, %s96
      %p100 = pneg %p94
      %p101 = scmp.eq.s32.totalorder %s17, 1
      %p102 = por %p100, %p101
      %p103 = scmp.ne.s32.totalorder %s95, %s98
      %p104 = scmp.eq.s32.totalorder %s17, 0
      %p105 = por %p103, %p104
      %p106 = scmp.ne.s32.totalorder %s95, %s98
      %p107 = scmp.eq.s32.totalorder %s22, 1
      %p108 = por %p106, %p107
      %p109 = scmp.ne.s32.totalorder %s98, %s99
      %p110 = scmp.eq.s32.totalorder %s22, 0
      %p111 = por %p109, %p110
      %p112 = scmp.ne.s32.totalorder %s98, %s99
      %p113 = scmp.eq.s32.totalorder %s23, 1
      %p114 = por %p112, %p113
      %p116 = scmp.ne.s32.totalorder %s99, %s115
      %p117 = scmp.eq.s32.totalorder %s23, 0
      %p118 = por %p116, %p117
      %s119 = ssub.s32 %s17, %s24
      %p120 = scmp.eq.s32.totalorder %s119, 0
      %s122 = sadd.s32 %s121, 1
      %s123 = scalar_select %p120, %s121, %s122
      %p126 = pneg %p120
      %p127 = scmp.eq.s32.totalorder %s17, 1
      %p128 = por %p126, %p127
      %p129 = scmp.ne.s32.totalorder %s121, %s124
      %p130 = scmp.eq.s32.totalorder %s17, 0
      %p131 = por %p129, %p130
      %p132 = scmp.ne.s32.totalorder %s121, %s124
      %p133 = scmp.eq.s32.totalorder %s22, 1
      %p134 = por %p132, %p133
      %p135 = scmp.ne.s32.totalorder %s124, %s125
      %p136 = scmp.eq.s32.totalorder %s22, 0
      %p137 = por %p135, %p136
      %p138 = scmp.ne.s32.totalorder %s124, %s125
      %p139 = scmp.eq.s32.totalorder %s23, 1
      %p140 = por %p138, %p139
      %p142 = scmp.ne.s32.totalorder %s125, %s141
      %p143 = scmp.eq.s32.totalorder %s23, 0
      %p144 = por %p142, %p143
      %p145 = scmp.le.s32.totalorder 1, %s17
      %p146 = scmp.lt.s32.totalorder %s17, 3
      %p147 = pnand %p145, %p146
      %p148 = pneg %p147
      // Predicated region
      $region9: #{tpu_custom_call.1} parent=5 // pred_check
        _
      $region10: #{tpu_custom_call.1} parent=5 // pred_check_branch
        %150 = sbr.rel (%p147) target = $region12
      $region11: #{tpu_custom_call.1} parent=5 // pred_region
        %s151 = ssub.s32 %s17, 1
        // Predicated region
        $region13: #{tpu_custom_call.1} parent=11 // pred_check
          %p152 = pneg %p64
        $region14: #{tpu_custom_call.1} parent=11 // pred_check_branch
          %154 = sbr.rel (%p152) target = $region16
        $region15: #{tpu_custom_call.1} parent=11 // pred_region
          _
        $region16: #{tpu_custom_call.1} parent=11 // pred_fallthru
          _
        // Predicated region
        $region17: #{tpu_custom_call.1} parent=11 // pred_check
          %p155 = pneg %p85
        $region18: #{tpu_custom_call.1} parent=11 // pred_check_branch
          %157 = sbr.rel (%p155) target = $region20
        $region19: #{tpu_custom_call.1} parent=11 // pred_region
          _
        $region20: #{tpu_custom_call.1} parent=11 // pred_fallthru
          _
      $region12: #{tpu_custom_call.1} parent=5 // pred_fallthru
        _
      %p158 = scmp.lt.s32.totalorder %s17, 2
      // Predicated region
      $region21: #{tpu_custom_call.1} parent=5 // pred_check
        %p159 = pneg %p158
      $region22: #{tpu_custom_call.1} parent=5 // pred_check_branch
        %161 = sbr.rel (%p159) target = $region24
      $region23: #{tpu_custom_call.1} parent=5 // pred_region
        // Predicated region
        $region25: #{tpu_custom_call.1} parent=23 // pred_check
          %p162 = pneg %p37
        $region26: #{tpu_custom_call.1} parent=23 // pred_check_branch
          %164 = sbr.rel (%p162) target = $region28
        $region27: #{tpu_custom_call.1} parent=23 // pred_region
          %s165 = smul.u32 2, %s17
          %p166 = scmp.lt.s32.totalorder %s165, 3
          %s167 = scalar_select %p166, %s165, 3
          %s168 = smul.addr %s167, 4
          %s169 = scalar_lea.vmem %s0, %s168
          %s170 = smul.u32 2, %s17
        $region28: #{tpu_custom_call.1} parent=23 // pred_fallthru
          _
      $region24: #{tpu_custom_call.1} parent=5 // pred_fallthru
        _
      %p171 = scmp.le.s32.totalorder 1, %s17
      %p172 = scmp.lt.s32.totalorder %s17, 3
      %p173 = pnand %p171, %p172
      %p174 = pneg %p173
      // Predicated region
      $region29: #{tpu_custom_call.1} parent=5 // pred_check
        _
      $region30: #{tpu_custom_call.1} parent=5 // pred_check_branch
        %176 = sbr.rel (%p173) target = $region32
      $region31: #{tpu_custom_call.1} parent=5 // pred_region
        %s177 = ssub.s32 %s17, 1
        %s178 = smul.u32 2, %s22
        %p179 = scmp.lt.s32.totalorder %s178, 3
        %s180 = scalar_select %p179, %s178, 3
        %s181 = smul.addr %s180, 4
        %s182 = scalar_lea.vmem %s0, %s181
        %p183 = pneg %p43
        %p184 = pneg %p40
        %p185 = pneg %p64
        %p186 = pneg %p61
        %p187 = pneg %p85
        %p188 = pneg %p82
        %p189 = pneg %p111
        %p190 = pneg %p108
        %s191 = sand.u32 %s98, 1
        %s192 = scalar_lea.sflag [#allocation3], %s191
        %s193 = sand.u32 %s98, 1
        %s194 = smul.addr %s193, 8
        %s195 = scalar_lea.vmem [#allocation2], %s194
        %p196 = pneg %p137
        %p197 = pneg %p134
        %s198 = sand.u32 %s124, 1
        %s199 = scalar_lea.sflag [#allocation5], %s198
        %s200 = sand.u32 %s124, 1
        %s201 = smul.addr %s200, 8
        %s202 = scalar_lea.vmem [#allocation4], %s201
        %s203 = smul.u32 2, %s22
        %p204 = scmp.lt.s32.totalorder %s203, 3
        %s205 = scalar_select %p204, %s203, 3
        %s206 = smul.addr %s205, 4
        %s207 = scalar_lea.vmem %s0, %s206
        %s208 = smul.u32 2, %s22
        %s209 = smul.u32 2, %s22
        %v211 = vld [vmem:[%s207] sm:$0xf]
        %v212 = vld [vmem:[%s207 + $0x4] sm:$0xf]
        %v213 = vld [vmem:[%s1] sm:$0xf]
        %v214 = vld [vmem:[%s1 + $0x4] sm:$0xf]
        %v215 = vld [vmem:[%s2] sm:$0x1]
        %v217 = vperm.slane %v215, 0
        %v221 = vunpack.c.l.b16 %v211
        %v222 = vunpack.c.l.b16 %v212
        %v223 = vpack.c.b16 %v222, %v221
        %v226 = vunpack.c.l.b16 %v213
        %v227 = vunpack.c.l.b16 %v214
        %v228 = vpack.c.b16 %v227, %v226
        %vm230 = vcmask 130048
        %v232 = vsel %vm230, %v223, 0
        %234 = vmatpush.bf16.msra.mxu0 0
        %235 = vmatpush.bf16.msra.mxu0 0
        %236 = vmatpush.bf16.msra.mxu0 0
        %237 = vmatpush.bf16.msra.mxu0 0
        %238 = vmatpush.bf16.msra.mxu0 0
        %239 = vmatpush.bf16.msra.mxu0 0
        %240 = vmatpush.bf16.msra.mxu0 0
        %241 = vmatpush.bf16.msra.mxu0 %v228
        %242 = vmatmul.bf16.gmra.mxu0 %v232
        %v243 = vpop.f32.mrf.mxu0
        %v244 = vadd.f32 %v217, %v243
        %v245 = vpop.f32.mrf.mxu0
        %v246 = vadd.f32 %v217, %v245
        %247 = vdwg.mxu0
        %v248 = vpack.c.bf16 %v244, %v244
        %v249 = vpack.c.bf16 %v246, %v246
        %250 = vst [vmem:[%s195] sm:$0xf] %v248
        %251 = vst [vmem:[%s195 + $0x4] sm:$0xf] %v249
        %v252 = vmul.f32 %v244, %v244
        %v253 = vmul.f32 %v246, %v246
        %v254 = vadd.f32 %v252, %v253
        %255 = vst [vmem:[%s202] sm:$0xff] %v254
        %s256 = sand.u32 %s98, 1
        %s257 = scalar_lea.sflag [#allocation3], %s256
        %s258 = sand.u32 %s98, 1
        %s259 = smul.addr %s258, 8
        %s260 = scalar_lea.vmem [#allocation2], %s259
        %s261 = sand.u32 %s124, 1
        %s262 = scalar_lea.sflag [#allocation5], %s261
        %s263 = sand.u32 %s124, 1
        %s264 = smul.addr %s263, 8
        %s265 = scalar_lea.vmem [#allocation4], %s264
        // Predicated region
        $region33: #{tpu_custom_call.1} parent=31 // pred_check
          %p266 = pneg %p108
        $region34: #{tpu_custom_call.1} parent=31 // pred_check_branch
          %268 = sbr.rel (%p266) target = $region36
        $region35: #{tpu_custom_call.1} parent=31 // pred_region
          %s269 = smul.u32 2, %s22
          %271 = vsyncadd %s257, 0
          %s272 = smul.addr %s269, 4
          %s273 = scalar_lea.hbm %s3, %s272
          %s274 = sshll.u32 %s260, 4
          %s275 = int_to_ptr.vmem [resolvable:$true] %s274
          %s276 = sshll.u32 %s273, 4
          %s277 = int_to_ptr.hbm [resolvable:$true] %s276
          %282 = dma.vmem_to_hbm [thread:$0]  %s275, 128, %s277, %s257, 64, 64, 4
        $region36: #{tpu_custom_call.1} parent=31 // pred_fallthru
          _
        // Predicated region
        $region37: #{tpu_custom_call.1} parent=31 // pred_check
          %p283 = pneg %p134
        $region38: #{tpu_custom_call.1} parent=31 // pred_check_branch
          %285 = sbr.rel (%p283) target = $region40
        $region39: #{tpu_custom_call.1} parent=31 // pred_region
          %287 = vsyncadd %s262, 0
          %s288 = smul.addr %s22, 8
          %s289 = scalar_lea.hbm %s4, %s288
          %s291 = sshll.u32 %s265, 4
          %s292 = int_to_ptr.vmem [resolvable:$true] %s291
          %s293 = sshll.u32 %s289, 4
          %s294 = int_to_ptr.hbm [resolvable:$true] %s293
          %296 = dma.vmem_to_hbm [thread:$0]  %s292, 128, %s294, %s262
        $region40: #{tpu_custom_call.1} parent=31 // pred_fallthru
          _
      $region32: #{tpu_custom_call.1} parent=5 // pred_fallthru
        _
      %p297 = scmp.le.s32.totalorder 2, %s17
      // Predicated region
      $region41: #{tpu_custom_call.1} parent=5 // pred_check
        %p298 = pneg %p297
      $region42: #{tpu_custom_call.1} parent=5 // pred_check_branch
        %300 = sbr.rel (%p298) target = $region44
      $region43: #{tpu_custom_call.1} parent=5 // pred_region
        %s301 = ssub.s32 %s17, 2
        // Predicated region
        $region45: #{tpu_custom_call.1} parent=43 // pred_check
          %p302 = pneg %p114
        $region46: #{tpu_custom_call.1} parent=43 // pred_check_branch
          %304 = sbr.rel (%p302) target = $region48
        $region47: #{tpu_custom_call.1} parent=43 // pred_region
          %s305 = sand.u32 %s99, 1
          %s306 = scalar_lea.sflag [#allocation3], %s305
          %s307 = sand.u32 %s99, 1
          %s308 = smul.addr %s307, 8
          %s309 = scalar_lea.vmem [#allocation2], %s308
          %311 = dma.done %s306, 128
        $region48: #{tpu_custom_call.1} parent=43 // pred_fallthru
          _
        // Predicated region
        $region49: #{tpu_custom_call.1} parent=43 // pred_check
          %p312 = pneg %p140
        $region50: #{tpu_custom_call.1} parent=43 // pred_check_branch
          %314 = sbr.rel (%p312) target = $region52
        $region51: #{tpu_custom_call.1} parent=43 // pred_region
          %s315 = sand.u32 %s125, 1
          %s316 = scalar_lea.sflag [#allocation5], %s315
          %s317 = sand.u32 %s125, 1
          %s318 = smul.addr %s317, 8
          %s319 = scalar_lea.vmem [#allocation4], %s318
          %321 = dma.done %s316, 128
        $region52: #{tpu_custom_call.1} parent=43 // pred_fallthru
          _
      $region44: #{tpu_custom_call.1} parent=5 // pred_fallthru
        _
    $region6: #{tpu_custom_call.1} parent=1 // loop_footer
      %s21 = sadd.s32 1, %s17
    $region7: #{tpu_custom_call.1} parent=1 // loop_footer_branch
      %16 = sbr.rel target = $region3
    $region8: #{tpu_custom_call.1} parent=1 // loop_exit
      _
    %322 = vsyncpa [#allocation3], 1
    %s323 = scalar_lea.sflag [#allocation3], 1
    %324 = vsyncpa %s323, 1
    %325 = vsyncpa [#allocation5], 1
    %s326 = scalar_lea.sflag [#allocation5], 1
    %327 = vsyncpa %s326, 1

</llo_original>
